<compile_context>
chip_gen: v5e
topology: v5e:2x2
jax: 0.10.0
libtpu: 0.0.40
codegen_flags: <defaults>
</compile_context>

<pallas_src>
import functools

import jax
import jax.numpy as jnp
from jax.experimental import pallas as pl
from jax.experimental.pallas import tpu as pltpu


def _leaky_relu(x, slope=0.01):
    # matches torch.nn.LeakyReLU default negative_slope=0.01
    return jnp.where(x > 0, x, slope * x)


def diffusion_kernel(
    samples_ref, pt_ref,
    # PointNet compressor (shared pointwise MLP) weights
    w1_ref, b1_ref, w2_ref, b2_ref, w3_ref, b3_ref,
    # diffusion head layer 1 (wd1 pre-split: encoder slice + [params|t] slice
    # with the time embedding folded in), layers 2/3
    wd1s_ref, wd1pt_ref, bd1_ref,
    wd2_ref, bd2_ref, wd3_ref, bd3_ref,
    out_ref,
    *, n_points,
):
    rows, _ = samples_ref.shape          # rows = TB * n_points
    tb = rows // n_points
    cdt = w1_ref.dtype                   # MXU operand dtype (f32 or bf16)

    # ---- PointNet compressor: shared pointwise MLP over every point (2D) ----
    x = samples_ref[...]
    h = _leaky_relu(
        jnp.dot(x.astype(cdt), w1_ref[...],
                preferred_element_type=jnp.float32) + b1_ref[...])
    h = _leaky_relu(
        jnp.dot(h.astype(cdt), w2_ref[...],
                preferred_element_type=jnp.float32) + b2_ref[...])
    h = jnp.dot(h.astype(cdt), w3_ref[...],
                preferred_element_type=jnp.float32) + b3_ref[...]
    latent = h.shape[-1]
    # max-pool over points -> per-event latent code (== .squeeze() in torch).
    # n_points is a multiple of 8 here, so the reshape is layout-compatible;
    # the axis-1 reduce is a small cross-sublane (XLU) reduce, far from the
    # binding resource at these sizes.
    samples_emb = jnp.max(h.reshape(tb, n_points, latent), axis=1)   # (TB, L)

    # ---- diffusion head layer 1: concat-free, time embedding pre-folded ----
    pt = pt_ref[...]                                                  # (TB, P+1)
    h = (jnp.dot(samples_emb.astype(cdt), wd1s_ref[...],
                 preferred_element_type=jnp.float32)
         + jnp.dot(pt.astype(cdt), wd1pt_ref[...],
                   preferred_element_type=jnp.float32)
         + bd1_ref[...])
    h = _leaky_relu(h)
    h = _leaky_relu(
        jnp.dot(h.astype(cdt), wd2_ref[...],
                preferred_element_type=jnp.float32) + bd2_ref[...])
    out_ref[...] = (jnp.dot(h.astype(cdt), wd3_ref[...],
                            preferred_element_type=jnp.float32)
                    + bd3_ref[...]).astype(out_ref.dtype)


# ----------------------------------------------------------------------------
# wrapper-side planning helpers
# ----------------------------------------------------------------------------
def _round_up(x, m):
    return ((x + m - 1) // m) * m


def _vmem_block_bytes(a):
    """Bytes one full-array (weight/bias) block occupies in native (8,128) tiles."""
    if a.ndim == 2:
        r, c = a.shape
    else:
        r, c = 1, a.shape[-1]
    return _round_up(max(r, 1), 8) * _round_up(max(c, 1), 128) * a.dtype.itemsize


def _tpu_generation_info():
    """(physical VMEM bytes per core, TensorCores per chip); conservative fallbacks."""
    vmem = None
    cores = None
    try:
        info = pltpu.get_tpu_info()
        for name in ("vmem_capacity_bytes", "vmem_size_bytes", "vmem_bytes"):
            v = getattr(info, name, None)
            if v:
                vmem = int(v)
                break
        for name in ("num_cores", "core_count", "tensorcore_count",
                     "num_tensorcores"):
            c = getattr(info, name, None)
            if c:
                cores = int(c)
                break
    except Exception:
        pass
    if vmem is None:
        vmem = 64 * 1024 * 1024      # conservative: v7x physical VMEM / core
    if cores is None:
        cores = 2                    # conservative: assume 2 TCs (v7x)
    return vmem, cores


def _plan_batch_tiles(batch, per_event_bytes, avail_bytes, num_cores):
    """Pick (tb, nb, padded_batch).

    Biggest batch tile that fits the VMEM budget; on multi-TensorCore chips
    keep an (even) number of grid steps >= num_cores whenever the batch is
    big enough, so the "parallel" grid axis can be sharded across cores.
    """
    nb = max(1, pl.cdiv(batch * per_event_bytes, max(avail_bytes, 1)))
    split_cores = num_cores > 1 and batch >= 64
    if split_cores:
        nb = _round_up(max(nb, num_cores), num_cores)
    if nb <= 1:
        return batch, 1, batch                     # single full-batch block
    tb = max(8, _round_up(pl.cdiv(batch, nb), 8))
    nb = pl.cdiv(batch, tb)
    if split_cores:
        nb = _round_up(nb, num_cores)
    b_pad = nb * tb
    return tb, nb, b_pad


# ----------------------------------------------------------------------------
# forward
# ----------------------------------------------------------------------------
def diffusion_model_forward(samples, t, params, weights, *,
                            compute_dtype=jnp.bfloat16,
                            pad_output_lanes=True):
    """Run the full DiffusionModel forward in one batch-tiled Pallas kernel."""
    (w1, b1, w2, b2, w3, b3, wt, bt, wd1, bd1, wd2, bd2, wd3, bd3) = weights
    B, N, D = samples.shape
    P = params.shape[-1]
    enc = w3.shape[-1]
    tdim = wt.shape[-1]
    hidden = wd1.shape[-1]

    # t.squeeze().unsqueeze(-1).float() equivalent; merge t into the params
    # stream so the kernel has no tiny (TB, 1) input tile.
    t = t.reshape(B, 1).astype(jnp.float32)
    pt = jnp.concatenate([params.astype(jnp.float32), t], axis=-1)   # (B, P+1)

    # Concat-free head layer 1: split wd1 into encoder / time / params rows and
    # fold the Linear(1, tdim) time embedding into the [params | t] matmul:
    #   t_emb @ wd1_t = t * (wt @ wd1_t) + bt @ wd1_t
    wd1_s = wd1[:enc]                                   # (enc, hidden)
    wd1_t = wd1[enc:enc + tdim]                         # (tdim, hidden)
    wd1_p = wd1[enc + tdim:]                            # (P, hidden)
    wd1_pt = jnp.concatenate([wd1_p, wt @ wd1_t], axis=0)   # (P+1, hidden)
    bd1_f = bd1 + bt @ wd1_t                                  # (1, hidden)

    # Output feature axis: lane-dense padded stores by default (best on
    # v6e/v7x); pad_output_lanes=False keeps the narrow masked-store layout
    # (worth benchmarking on v5e, where write amplification is costliest).
    if pad_output_lanes:
        out_dim = max(128, _round_up(P, 128))
        wd3k = jnp.zeros((hidden, out_dim), jnp.float32).at[:, :P].set(wd3)
        bd3k = jnp.zeros((1, out_dim), jnp.float32).at[:, :P].set(bd3)
    else:
        out_dim = P
        wd3k, bd3k = wd3, bd3

    # Only weight matrices are cast to the MXU compute dtype; samples/params
    # stay f32 in HBM (in-kernel .astype), biases/accumulation stay f32.
    mats = [w1, w2, w3, wd1_s, wd1_pt, wd2, wd3k]
    if compute_dtype != jnp.float32:
        mats = [m.astype(compute_dtype) for m in mats]
    w1c, w2c, w3c, wd1s_c, wd1pt_c, wd2c, wd3c = mats

    weight_args = (w1c, b1, w2c, b2, w3c, b3,
                   wd1s_c, wd1pt_c, bd1_f, wd2c, bd2, wd3c, bd3k)

    # ---- generation-aware VMEM budget & batch tile --------------------------
    vmem_phys, num_cores = _tpu_generation_info()
    if vmem_phys <= 64 * 1024 * 1024:                 # v7x-class (64 MiB VMEM)
        vmem_limit, tile_budget = 32 * 1024 * 1024, 26 * 1024 * 1024
    else:                                             # v5e / v6e (128 MiB VMEM)
        vmem_limit, tile_budget = 64 * 1024 * 1024, 56 * 1024 * 1024

    weights_vmem = 2 * sum(_vmem_block_bytes(a) for a in weight_args)

    lane, f32b = 128, 4
    samp_row = _round_up(D, lane) * f32b              # lane-padded samples row
    act_row = _round_up(max(w1.shape[1], w2.shape[1], enc, 1), lane) * f32b
    head_row = _round_up(hidden, lane) * f32b
    per_event = 2 * N * samp_row                      # samples block, 2 buffers
    per_event += 4 * N * act_row                      # live point-MLP activations
    per_event += 2 * _round_up(P + 1, lane) * f32b    # pt block, 2 buffers
    per_event += 2 * _round_up(out_dim, lane) * f32b  # out block, 2 buffers
    per_event += 4 * head_row                         # head activations
    avail = max(tile_budget - weights_vmem, 8 * per_event)

    tb, nb, b_pad = _plan_batch_tiles(B, per_event, avail, num_cores)

    if b_pad != B:
        pad = b_pad - B
        samples = jnp.pad(samples, ((0, pad), (0, 0), (0, 0)))
        pt = jnp.pad(pt, ((0, pad), (0, 0)))

    # merge (B, N, D) -> (B*N, D): free layout plumbing, keeps the shared
    # pointwise MLP as plain 2D MXU matmuls.
    samples2d = samples.reshape(b_pad * N, D)

    args = (samples2d, pt) + weight_args

    in_specs = [
        pl.BlockSpec((tb * N, D), lambda i: (i, 0)),     # samples rows tile
        pl.BlockSpec((tb, P + 1), lambda i: (i, 0)),     # [params | t] tile
    ] + [pl.BlockSpec(a.shape, lambda i: (0, 0)) for a in weight_args]

    out_specs = pl.BlockSpec((tb, out_dim), lambda i: (i, 0))

    kernel = functools.partial(diffusion_kernel, n_points=N)

    out = pl.pallas_call(
        kernel,
        out_shape=jax.ShapeDtypeStruct((b_pad, out_dim), jnp.float32),
        grid_spec=pltpu.PrefetchScalarGridSpec(
            num_scalar_prefetch=0,
            grid=(nb,),
            in_specs=in_specs,
            out_specs=out_specs,
        ),
        compiler_params=pltpu.CompilerParams(
            dimension_semantics=("parallel",),
            vmem_limit_bytes=vmem_limit,
        ),
    )(*args)

    return out[:B, :P]


# ----------------------------------------------------------------------------
# weights + plain-JAX reference
# ----------------------------------------------------------------------------
def _init_linear(key, fan_in, fan_out):
    """Deterministic PyTorch-style uniform(-1/sqrt(fan_in), 1/sqrt(fan_in))."""
    kw, kb = jax.random.split(key)
    bound = 1.0 / jnp.sqrt(fan_in)
    w = jax.random.uniform(kw, (fan_in, fan_out), jnp.float32, -bound, bound)
    b = jax.random.uniform(kb, (1, fan_out), jnp.float32, -bound, bound)
    return w, b


def make_weights(key, sample_dim, param_dim, hidden_dim,
                 time_embedding_dim, sample_encode_dim,
                 pn_h1=32, pn_h2=64):
    keys = jax.random.split(key, 7)
    # PointNet compressor: pointwise MLP sample_dim -> pn_h1 -> pn_h2 -> latent
    w1, b1 = _init_linear(keys[0], sample_dim, pn_h1)
    w2, b2 = _init_linear(keys[1], pn_h1, pn_h2)
    w3, b3 = _init_linear(keys[2], pn_h2, sample_encode_dim)
    # time embedding Linear(1, time_embedding_dim)
    wt, bt = _init_linear(keys[3], 1, time_embedding_dim)
    # diffusion head
    in_dim = sample_encode_dim + time_embedding_dim + param_dim
    wd1, bd1 = _init_linear(keys[4], in_dim, hidden_dim)
    wd2, bd2 = _init_linear(keys[5], hidden_dim, hidden_dim)
    wd3, bd3 = _init_linear(keys[6], hidden_dim, param_dim)
    return (w1, b1, w2, b2, w3, b3, wt, bt, wd1, bd1, wd2, bd2, wd3, bd3)


def reference_forward(samples, t, params, weights):
    """Plain-JAX reference mirroring the PyTorch forward."""
    (w1, b1, w2, b2, w3, b3, wt, bt, wd1, bd1, wd2, bd2, wd3, bd3) = weights
    h = _leaky_relu(samples @ w1 + b1)
    h = _leaky_relu(h @ w2 + b2)
    h = h @ w3 + b3
    samples_emb = jnp.max(h, axis=1)
    t_emb = t.reshape(-1, 1) @ wt + bt
    combined = jnp.concatenate([samples_emb, t_emb, params], axis=-1)
    h = _leaky_relu(combined @ wd1 + bd1)
    h = _leaky_relu(h @ wd2 + bd2)
    return h @ wd3 + bd3


if __name__ == "__main__":
    # Small, forward-consistent shapes
    B = 2                 # batch (events)
    N_POINTS = 16         # points per event
    SAMPLE_DIM = 4        # per-point feature dim
    PARAM_DIM = 8
    HIDDEN_DIM = 32
    TIME_EMB_DIM = 16
    SAMPLE_ENC_DIM = 16

    key = jax.random.PRNGKey(0)
    k_s, k_t, k_p, k_w = jax.random.split(key, 4)

    samples = jax.random.normal(k_s, (B, N_POINTS, SAMPLE_DIM), jnp.float32)
    t = jax.random.uniform(k_t, (B, 1), jnp.float32, 0.0, 1.0)  # normalized t
    params = jax.random.normal(k_p, (B, PARAM_DIM), jnp.float32)

    weights = make_weights(k_w, SAMPLE_DIM, PARAM_DIM, HIDDEN_DIM,
                           TIME_EMB_DIM, SAMPLE_ENC_DIM)

    ref = jax.block_until_ready(reference_forward(samples, t, params, weights))

    # f32 MXU path: tight check against the plain-JAX reference
    out_f32 = jax.block_until_ready(
        diffusion_model_forward(samples, t, params, weights,
                                compute_dtype=jnp.float32))
    assert out_f32.shape == (B, PARAM_DIM)
    assert jnp.allclose(out_f32, ref, atol=1e-3, rtol=1e-3)

    # default bf16 MXU-operand path (f32 accumulation/activations); loose check
    out_bf16 = jax.block_until_ready(
        diffusion_model_forward(samples, t, params, weights))
    assert out_bf16.shape == (B, PARAM_DIM)
    assert bool(jnp.all(jnp.isfinite(out_bf16)))
    assert jnp.allclose(out_bf16, ref, atol=1e-1, rtol=1e-1)

    # narrow (masked-store) output layout path, for the v5e trade-off
    out_narrow = jax.block_until_ready(
        diffusion_model_forward(samples, t, params, weights,
                                compute_dtype=jnp.float32,
                                pad_output_lanes=False))
    assert out_narrow.shape == (B, PARAM_DIM)
    assert jnp.allclose(out_narrow, ref, atol=1e-3, rtol=1e-3)

    print("KERNEL_OK")
</pallas_src>

<mosaic_0001>
module attributes {stable_mosaic.version = 11 : i64} {
  func.func @diffusion_kernel(%arg0: i32, %arg1: memref<32x4xf32, #tpu.memory_space<vmem>>, %arg2: memref<2x9xf32, #tpu.memory_space<vmem>>, %arg3: memref<4x32xf32, #tpu.memory_space<vmem>>, %arg4: memref<1x32xf32, #tpu.memory_space<vmem>>, %arg5: memref<32x64xf32, #tpu.memory_space<vmem>>, %arg6: memref<1x64xf32, #tpu.memory_space<vmem>>, %arg7: memref<64x16xf32, #tpu.memory_space<vmem>>, %arg8: memref<1x16xf32, #tpu.memory_space<vmem>>, %arg9: memref<16x32xf32, #tpu.memory_space<vmem>>, %arg10: memref<9x32xf32, #tpu.memory_space<vmem>>, %arg11: memref<1x32xf32, #tpu.memory_space<vmem>>, %arg12: memref<32x32xf32, #tpu.memory_space<vmem>>, %arg13: memref<1x32xf32, #tpu.memory_space<vmem>>, %arg14: memref<32x128xf32, #tpu.memory_space<vmem>>, %arg15: memref<1x128xf32, #tpu.memory_space<vmem>>, %arg16: memref<2x128xf32, #tpu.memory_space<vmem>>) attributes {dimension_semantics = [#tpu.dimension_semantics<parallel>], iteration_bounds = array<i64: 1>, scalar_prefetch = 0 : i64, scratch_operands = 0 : i64, tpu.core_type = #tpu.core_type<tc>, window_params = [{transform_indices = @transform_0, window_bounds = array<i64: 32, 4>}, {transform_indices = @transform_1, window_bounds = array<i64: 2, 9>}, {pipeline_mode = #tpu.pipeline_mode<synchronous>, transform_indices = @transform_2, window_bounds = array<i64: 4, 32>}, {pipeline_mode = #tpu.pipeline_mode<synchronous>, transform_indices = @transform_3, window_bounds = array<i64: 1, 32>}, {pipeline_mode = #tpu.pipeline_mode<synchronous>, transform_indices = @transform_4, window_bounds = array<i64: 32, 64>}, {pipeline_mode = #tpu.pipeline_mode<synchronous>, transform_indices = @transform_5, window_bounds = array<i64: 1, 64>}, {pipeline_mode = #tpu.pipeline_mode<synchronous>, transform_indices = @transform_6, window_bounds = array<i64: 64, 16>}, {pipeline_mode = #tpu.pipeline_mode<synchronous>, transform_indices = @transform_7, window_bounds = array<i64: 1, 16>}, {pipeline_mode = #tpu.pipeline_mode<synchronous>, transform_indices = @transform_8, window_bounds = array<i64: 16, 32>}, {pipeline_mode = #tpu.pipeline_mode<synchronous>, transform_indices = @transform_9, window_bounds = array<i64: 9, 32>}, {pipeline_mode = #tpu.pipeline_mode<synchronous>, transform_indices = @transform_10, window_bounds = array<i64: 1, 32>}, {pipeline_mode = #tpu.pipeline_mode<synchronous>, transform_indices = @transform_11, window_bounds = array<i64: 32, 32>}, {pipeline_mode = #tpu.pipeline_mode<synchronous>, transform_indices = @transform_12, window_bounds = array<i64: 1, 32>}, {pipeline_mode = #tpu.pipeline_mode<synchronous>, transform_indices = @transform_13, window_bounds = array<i64: 32, 128>}, {pipeline_mode = #tpu.pipeline_mode<synchronous>, transform_indices = @transform_14, window_bounds = array<i64: 1, 128>}, {transform_indices = @transform_15, window_bounds = array<i64: 2, 128>}]} {
    %c0 = arith.constant 0 : index
    %c0_0 = arith.constant 0 : index
    %0 = vector.load %arg1[%c0, %c0_0] : memref<32x4xf32, #tpu.memory_space<vmem>>, vector<32x4xf32>
    %c0_1 = arith.constant 0 : index
    %c0_2 = arith.constant 0 : index
    %1 = vector.load %arg3[%c0_1, %c0_2] : memref<4x32xf32, #tpu.memory_space<vmem>>, vector<4x32xf32>
    %cst = arith.constant dense<0.000000e+00> : vector<32x32xf32>
    %2 = tpu.matmul %0, %1, %cst {dimension_numbers = #tpu.dot_dimension_numbers<[1], [0], [0], [1], [0, 0, 1, 1], [], []>} : vector<32x4xf32>, vector<4x32xf32>, vector<32x32xf32> -> vector<32x32xf32>
    %c0_3 = arith.constant 0 : index
    %c0_4 = arith.constant 0 : index
    %3 = vector.load %arg4[%c0_3, %c0_4] : memref<1x32xf32, #tpu.memory_space<vmem>>, vector<1x32xf32>
    %4 = vector.broadcast %3 : vector<1x32xf32> to vector<32x32xf32>
    %5 = arith.addf %2, %4 : vector<32x32xf32>
    %cst_5 = arith.constant 0.000000e+00 : f32
    %6 = vector.broadcast %cst_5 : f32 to vector<32x32xf32>
    %7 = arith.cmpf ogt, %5, %6 : vector<32x32xf32>
    %cst_6 = arith.constant 0.00999999977 : f32
    %8 = vector.broadcast %cst_6 : f32 to vector<32x32xf32>
    %9 = arith.mulf %8, %5 : vector<32x32xf32>
    %10 = arith.select %7, %5, %9 : vector<32x32xi1>, vector<32x32xf32>
    %c0_7 = arith.constant 0 : index
    %c0_8 = arith.constant 0 : index
    %11 = vector.load %arg5[%c0_7, %c0_8] : memref<32x64xf32, #tpu.memory_space<vmem>>, vector<32x64xf32>
    %cst_9 = arith.constant dense<0.000000e+00> : vector<32x64xf32>
    %12 = tpu.matmul %10, %11, %cst_9 {dimension_numbers = #tpu.dot_dimension_numbers<[1], [0], [0], [1], [0, 0, 1, 1], [], []>} : vector<32x32xf32>, vector<32x64xf32>, vector<32x64xf32> -> vector<32x64xf32>
    %c0_10 = arith.constant 0 : index
    %c0_11 = arith.constant 0 : index
    %13 = vector.load %arg6[%c0_10, %c0_11] : memref<1x64xf32, #tpu.memory_space<vmem>>, vector<1x64xf32>
    %14 = vector.broadcast %13 : vector<1x64xf32> to vector<32x64xf32>
    %15 = arith.addf %12, %14 : vector<32x64xf32>
    %cst_12 = arith.constant 0.000000e+00 : f32
    %16 = vector.broadcast %cst_12 : f32 to vector<32x64xf32>
    %17 = arith.cmpf ogt, %15, %16 : vector<32x64xf32>
    %cst_13 = arith.constant 0.00999999977 : f32
    %18 = vector.broadcast %cst_13 : f32 to vector<32x64xf32>
    %19 = arith.mulf %18, %15 : vector<32x64xf32>
    %20 = arith.select %17, %15, %19 : vector<32x64xi1>, vector<32x64xf32>
    %c0_14 = arith.constant 0 : index
    %c0_15 = arith.constant 0 : index
    %21 = vector.load %arg7[%c0_14, %c0_15] : memref<64x16xf32, #tpu.memory_space<vmem>>, vector<64x16xf32>
    %cst_16 = arith.constant dense<0.000000e+00> : vector<32x16xf32>
    %22 = tpu.matmul %20, %21, %cst_16 {dimension_numbers = #tpu.dot_dimension_numbers<[1], [0], [0], [1], [0, 0, 1, 1], [], []>} : vector<32x64xf32>, vector<64x16xf32>, vector<32x16xf32> -> vector<32x16xf32>
    %c0_17 = arith.constant 0 : index
    %c0_18 = arith.constant 0 : index
    %23 = vector.load %arg8[%c0_17, %c0_18] : memref<1x16xf32, #tpu.memory_space<vmem>>, vector<1x16xf32>
    %24 = vector.broadcast %23 : vector<1x16xf32> to vector<32x16xf32>
    %25 = arith.addf %22, %24 : vector<32x16xf32>
    %26 = vector.shape_cast %25 : vector<32x16xf32> to vector<2x16x16xf32>
    %cst_19 = arith.constant dense<0xFF800000> : vector<2x16xf32>
    %27 = vector.multi_reduction <maximumf>, %26, %cst_19 [1] : vector<2x16x16xf32> to vector<2x16xf32>
    %c0_20 = arith.constant 0 : index
    %c0_21 = arith.constant 0 : index
    %28 = vector.load %arg2[%c0_20, %c0_21] : memref<2x9xf32, #tpu.memory_space<vmem>>, vector<2x9xf32>
    %c0_22 = arith.constant 0 : index
    %c0_23 = arith.constant 0 : index
    %29 = vector.load %arg9[%c0_22, %c0_23] : memref<16x32xf32, #tpu.memory_space<vmem>>, vector<16x32xf32>
    %cst_24 = arith.constant dense<0.000000e+00> : vector<2x32xf32>
    %30 = tpu.matmul %27, %29, %cst_24 {dimension_numbers = #tpu.dot_dimension_numbers<[1], [0], [0], [1], [0, 0, 1, 1], [], []>} : vector<2x16xf32>, vector<16x32xf32>, vector<2x32xf32> -> vector<2x32xf32>
    %c0_25 = arith.constant 0 : index
    %c0_26 = arith.constant 0 : index
    %31 = vector.load %arg10[%c0_25, %c0_26] : memref<9x32xf32, #tpu.memory_space<vmem>>, vector<9x32xf32>
    %cst_27 = arith.constant dense<0.000000e+00> : vector<2x32xf32>
    %32 = tpu.matmul %28, %31, %cst_27 {dimension_numbers = #tpu.dot_dimension_numbers<[1], [0], [0], [1], [0, 0, 1, 1], [], []>} : vector<2x9xf32>, vector<9x32xf32>, vector<2x32xf32> -> vector<2x32xf32>
    %33 = arith.addf %30, %32 : vector<2x32xf32>
    %c0_28 = arith.constant 0 : index
    %c0_29 = arith.constant 0 : index
    %34 = vector.load %arg11[%c0_28, %c0_29] : memref<1x32xf32, #tpu.memory_space<vmem>>, vector<1x32xf32>
    %35 = vector.broadcast %34 : vector<1x32xf32> to vector<2x32xf32>
    %36 = arith.addf %33, %35 : vector<2x32xf32>
    %cst_30 = arith.constant 0.000000e+00 : f32
    %37 = vector.broadcast %cst_30 : f32 to vector<2x32xf32>
    %38 = arith.cmpf ogt, %36, %37 : vector<2x32xf32>
    %cst_31 = arith.constant 0.00999999977 : f32
    %39 = vector.broadcast %cst_31 : f32 to vector<2x32xf32>
    %40 = arith.mulf %39, %36 : vector<2x32xf32>
    %41 = arith.select %38, %36, %40 : vector<2x32xi1>, vector<2x32xf32>
    %c0_32 = arith.constant 0 : index
    %c0_33 = arith.constant 0 : index
    %42 = vector.load %arg12[%c0_32, %c0_33] : memref<32x32xf32, #tpu.memory_space<vmem>>, vector<32x32xf32>
    %cst_34 = arith.constant dense<0.000000e+00> : vector<2x32xf32>
    %43 = tpu.matmul %41, %42, %cst_34 {dimension_numbers = #tpu.dot_dimension_numbers<[1], [0], [0], [1], [0, 0, 1, 1], [], []>} : vector<2x32xf32>, vector<32x32xf32>, vector<2x32xf32> -> vector<2x32xf32>
    %c0_35 = arith.constant 0 : index
    %c0_36 = arith.constant 0 : index
    %44 = vector.load %arg13[%c0_35, %c0_36] : memref<1x32xf32, #tpu.memory_space<vmem>>, vector<1x32xf32>
    %45 = vector.broadcast %44 : vector<1x32xf32> to vector<2x32xf32>
    %46 = arith.addf %43, %45 : vector<2x32xf32>
    %cst_37 = arith.constant 0.000000e+00 : f32
    %47 = vector.broadcast %cst_37 : f32 to vector<2x32xf32>
    %48 = arith.cmpf ogt, %46, %47 : vector<2x32xf32>
    %cst_38 = arith.constant 0.00999999977 : f32
    %49 = vector.broadcast %cst_38 : f32 to vector<2x32xf32>
    %50 = arith.mulf %49, %46 : vector<2x32xf32>
    %51 = arith.select %48, %46, %50 : vector<2x32xi1>, vector<2x32xf32>
    %c0_39 = arith.constant 0 : index
    %c0_40 = arith.constant 0 : index
    %52 = vector.load %arg14[%c0_39, %c0_40] : memref<32x128xf32, #tpu.memory_space<vmem>>, vector<32x128xf32>
    %cst_41 = arith.constant dense<0.000000e+00> : vector<2x128xf32>
    %53 = tpu.matmul %51, %52, %cst_41 {dimension_numbers = #tpu.dot_dimension_numbers<[1], [0], [0], [1], [0, 0, 1, 1], [], []>} : vector<2x32xf32>, vector<32x128xf32>, vector<2x128xf32> -> vector<2x128xf32>
    %c0_42 = arith.constant 0 : index
    %c0_43 = arith.constant 0 : index
    %54 = vector.load %arg15[%c0_42, %c0_43] : memref<1x128xf32, #tpu.memory_space<vmem>>, vector<1x128xf32>
    %55 = vector.broadcast %54 : vector<1x128xf32> to vector<2x128xf32>
    %56 = arith.addf %53, %55 : vector<2x128xf32>
    %c0_44 = arith.constant 0 : index
    %c0_45 = arith.constant 0 : index
    %57 = vector.load %arg16[%c0_44, %c0_45] : memref<2x128xf32, #tpu.memory_space<vmem>>, vector<2x128xf32>
    tpu.vector_store %arg16[%c0_44, %c0_45], %56 {strides = array<i32>} : memref<2x128xf32, #tpu.memory_space<vmem>>, vector<2x128xf32>,
    return
  }
  func.func @transform_0(%arg0: i32) -> (i32, i32) {
    %c0_i32 = arith.constant 0 : i32
    %c0_i32_0 = arith.constant 0 : i32
    return %arg0, %c0_i32 : i32, i32
  }
  func.func @transform_1(%arg0: i32) -> (i32, i32) {
    %c0_i32 = arith.constant 0 : i32
    %c0_i32_0 = arith.constant 0 : i32
    return %arg0, %c0_i32 : i32, i32
  }
  func.func @transform_2(%arg0: i32) -> (i32, i32) {
    %c0_i32 = arith.constant 0 : i32
    %c0_i32_0 = arith.constant 0 : i32
    %c0_i32_1 = arith.constant 0 : i32
    return %c0_i32, %c0_i32_0 : i32, i32
  }
  func.func @transform_3(%arg0: i32) -> (i32, i32) {
    %c0_i32 = arith.constant 0 : i32
    %c0_i32_0 = arith.constant 0 : i32
    %c0_i32_1 = arith.constant 0 : i32
    return %c0_i32, %c0_i32_0 : i32, i32
  }
  func.func @transform_4(%arg0: i32) -> (i32, i32) {
    %c0_i32 = arith.constant 0 : i32
    %c0_i32_0 = arith.constant 0 : i32
    %c0_i32_1 = arith.constant 0 : i32
    return %c0_i32, %c0_i32_0 : i32, i32
  }
  func.func @transform_5(%arg0: i32) -> (i32, i32) {
    %c0_i32 = arith.constant 0 : i32
    %c0_i32_0 = arith.constant 0 : i32
    %c0_i32_1 = arith.constant 0 : i32
    return %c0_i32, %c0_i32_0 : i32, i32
  }
  func.func @transform_6(%arg0: i32) -> (i32, i32) {
    %c0_i32 = arith.constant 0 : i32
    %c0_i32_0 = arith.constant 0 : i32
    %c0_i32_1 = arith.constant 0 : i32
    return %c0_i32, %c0_i32_0 : i32, i32
  }
  func.func @transform_7(%arg0: i32) -> (i32, i32) {
    %c0_i32 = arith.constant 0 : i32
    %c0_i32_0 = arith.constant 0 : i32
    %c0_i32_1 = arith.constant 0 : i32
    return %c0_i32, %c0_i32_0 : i32, i32
  }
  func.func @transform_8(%arg0: i32) -> (i32, i32) {
    %c0_i32 = arith.constant 0 : i32
    %c0_i32_0 = arith.constant 0 : i32
    %c0_i32_1 = arith.constant 0 : i32
    return %c0_i32, %c0_i32_0 : i32, i32
  }
  func.func @transform_9(%arg0: i32) -> (i32, i32) {
    %c0_i32 = arith.constant 0 : i32
    %c0_i32_0 = arith.constant 0 : i32
    %c0_i32_1 = arith.constant 0 : i32
    return %c0_i32, %c0_i32_0 : i32, i32
  }
  func.func @transform_10(%arg0: i32) -> (i32, i32) {
    %c0_i32 = arith.constant 0 : i32
    %c0_i32_0 = arith.constant 0 : i32
    %c0_i32_1 = arith.constant 0 : i32
    return %c0_i32, %c0_i32_0 : i32, i32
  }
  func.func @transform_11(%arg0: i32) -> (i32, i32) {
    %c0_i32 = arith.constant 0 : i32
    %c0_i32_0 = arith.constant 0 : i32
    %c0_i32_1 = arith.constant 0 : i32
    return %c0_i32, %c0_i32_0 : i32, i32
  }
  func.func @transform_12(%arg0: i32) -> (i32, i32) {
    %c0_i32 = arith.constant 0 : i32
    %c0_i32_0 = arith.constant 0 : i32
    %c0_i32_1 = arith.constant 0 : i32
    return %c0_i32, %c0_i32_0 : i32, i32
  }
  func.func @transform_13(%arg0: i32) -> (i32, i32) {
    %c0_i32 = arith.constant 0 : i32
    %c0_i32_0 = arith.constant 0 : i32
    %c0_i32_1 = arith.constant 0 : i32
    return %c0_i32, %c0_i32_0 : i32, i32
  }
  func.func @transform_14(%arg0: i32) -> (i32, i32) {
    %c0_i32 = arith.constant 0 : i32
    %c0_i32_0 = arith.constant 0 : i32
    %c0_i32_1 = arith.constant 0 : i32
    return %c0_i32, %c0_i32_0 : i32, i32
  }
  func.func @transform_15(%arg0: i32) -> (i32, i32) {
    %c0_i32 = arith.constant 0 : i32
    %c0_i32_0 = arith.constant 0 : i32
    return %arg0, %c0_i32 : i32, i32
  }
}

</mosaic_0001>

<llo_original>
// kernel: tpu_custom_call.1
$region0: #{tpu_custom_call.1}
  #allocation0 [shape = 'u32[]', space=smem, size = 0x4, offset = 0x4, fixed_abs, tag = 'smem constant byte address 0x4 - core index']
  #allocation1 [shape = 'u32[72,128]{1,0:T(1,128)}', space=vmem, size = 0x9000, scoped, tag = 'internal scratch']
  %s0 = inlined_call_operand.vmem [shape: f32[32,4], index: 0, kind: input, shape index: {}]
  %s1 = inlined_call_operand.hbm [shape: f32[2,9], index: 1, kind: input, shape index: {}]
  %s2 = inlined_call_operand.vmem [shape: f32[4,32], index: 2, kind: input, shape index: {}]
  %s3 = inlined_call_operand.vmem [shape: f32[1,32], index: 3, kind: input, shape index: {}]
  %s4 = inlined_call_operand.vmem [shape: f32[32,64], index: 4, kind: input, shape index: {}]
  %s5 = inlined_call_operand.vmem [shape: f32[1,64], index: 5, kind: input, shape index: {}]
  %s6 = inlined_call_operand.vmem [shape: f32[64,16], index: 6, kind: input, shape index: {}]
  %s7 = inlined_call_operand.vmem [shape: f32[1,16], index: 7, kind: input, shape index: {}]
  %s8 = inlined_call_operand.hbm [shape: f32[16,32], index: 8, kind: input, shape index: {}]
  %s9 = inlined_call_operand.hbm [shape: f32[9,32], index: 9, kind: input, shape index: {}]
  %s10 = inlined_call_operand.vmem [shape: f32[1,32], index: 10, kind: input, shape index: {}]
  %s11 = inlined_call_operand.vmem [shape: f32[32,32], index: 11, kind: input, shape index: {}]
  %s12 = inlined_call_operand.vmem [shape: f32[1,32], index: 12, kind: input, shape index: {}]
  %s13 = inlined_call_operand.vmem [shape: f32[32,128], index: 13, kind: input, shape index: {}]
  %s14 = inlined_call_operand.vmem [shape: f32[1,128], index: 14, kind: input, shape index: {}]
  %s15 = inlined_call_operand.hbm [shape: f32[2,128], index: 15, kind: output, shape index: {}]
  %s16 = sld [smem:[#allocation0]]
  $region82: #{tpu_custom_call.1} parent=0
    _
  %s18 = ssub.s32 1, %s16
  %s19 = scalar_select 0, %s18, %s16
  $region1: #{tpu_custom_call.1} parent=0
    #allocation2 [shape = 'u8[1024]{0}', space=vmem, size = 0x400, scoped, tag = 'input window, operand 1, single buffered']
    #allocation3 [shape = 's32[1]{0}', space=sflag, size = 0x4, scoped, tag = 'scoped memory for tpu_custom_call.1']
    #allocation4 [shape = 's32[1]{0}', space=sflag, size = 0x4, scoped, tag = 'scoped memory for tpu_custom_call.1']
    #allocation5 [shape = 'u8[8192]{0}', space=vmem, size = 0x2000, scoped, tag = 'input window, operand 8, single buffered']
    #allocation6 [shape = 's32[1]{0}', space=sflag, size = 0x4, scoped, tag = 'scoped memory for tpu_custom_call.1']
    #allocation7 [shape = 'u8[8192]{0}', space=vmem, size = 0x2000, scoped, tag = 'input window, operand 9, single buffered']
    #allocation8 [shape = 'u8[1024]{0}', space=vmem, size = 0x400, scoped, tag = 'output window, operand 0, single buffered']
    %20 = vsyncpa [#allocation3], 0
    %21 = vsyncpa [#allocation6], 0
    %22 = vsyncpa [#allocation4], 0
    // Predicated region
    $region2: #{tpu_custom_call.1} parent=1 // pred_check
      _
    $region3: #{tpu_custom_call.1} parent=1 // pred_check_branch
      %24 = sbr.rel (0) target = $region5
    $region4: #{tpu_custom_call.1} parent=1 // pred_region
      _
    $region5: #{tpu_custom_call.1} parent=1 // pred_fallthru
      _
    // Predicated region
    $region6: #{tpu_custom_call.1} parent=1 // pred_check
      _
    $region7: #{tpu_custom_call.1} parent=1 // pred_check_branch
      %26 = sbr.rel (0) target = $region9
    $region8: #{tpu_custom_call.1} parent=1 // pred_region
      %28 = vsyncadd [#allocation3], 0
      %s30 = sshll.u32 %s1, 4
      %s31 = int_to_ptr.hbm [resolvable:$true] %s30
      %s32 = sshll.u32 [#allocation2], 4
      %s33 = int_to_ptr.vmem [resolvable:$true] %s32
      %35 = dma.hbm_to_vmem [thread:$0]  %s31, 32, %s33, [#allocation3]
    $region9: #{tpu_custom_call.1} parent=1 // pred_fallthru
      _
    // Predicated region
    $region10: #{tpu_custom_call.1} parent=1 // pred_check
      _
    $region11: #{tpu_custom_call.1} parent=1 // pred_check_branch
      %37 = sbr.rel (0) target = $region13
    $region12: #{tpu_custom_call.1} parent=1 // pred_region
      _
    $region13: #{tpu_custom_call.1} parent=1 // pred_fallthru
      _
    // Predicated region
    $region14: #{tpu_custom_call.1} parent=1 // pred_check
      _
    $region15: #{tpu_custom_call.1} parent=1 // pred_check_branch
      %39 = sbr.rel (0) target = $region17
    $region16: #{tpu_custom_call.1} parent=1 // pred_region
      _
    $region17: #{tpu_custom_call.1} parent=1 // pred_fallthru
      _
    // Predicated region
    $region18: #{tpu_custom_call.1} parent=1 // pred_check
      _
    $region19: #{tpu_custom_call.1} parent=1 // pred_check_branch
      %41 = sbr.rel (0) target = $region21
    $region20: #{tpu_custom_call.1} parent=1 // pred_region
      _
    $region21: #{tpu_custom_call.1} parent=1 // pred_fallthru
      _
    // Predicated region
    $region22: #{tpu_custom_call.1} parent=1 // pred_check
      _
    $region23: #{tpu_custom_call.1} parent=1 // pred_check_branch
      %43 = sbr.rel (0) target = $region25
    $region24: #{tpu_custom_call.1} parent=1 // pred_region
      _
    $region25: #{tpu_custom_call.1} parent=1 // pred_fallthru
      _
    // Predicated region
    $region26: #{tpu_custom_call.1} parent=1 // pred_check
      _
    $region27: #{tpu_custom_call.1} parent=1 // pred_check_branch
      %45 = sbr.rel (0) target = $region29
    $region28: #{tpu_custom_call.1} parent=1 // pred_region
      _
    $region29: #{tpu_custom_call.1} parent=1 // pred_fallthru
      _
    // Predicated region
    $region30: #{tpu_custom_call.1} parent=1 // pred_check
      _
    $region31: #{tpu_custom_call.1} parent=1 // pred_check_branch
      %47 = sbr.rel (0) target = $region33
    $region32: #{tpu_custom_call.1} parent=1 // pred_region
      _
    $region33: #{tpu_custom_call.1} parent=1 // pred_fallthru
      _
    // Predicated region
    $region34: #{tpu_custom_call.1} parent=1 // pred_check
      _
    $region35: #{tpu_custom_call.1} parent=1 // pred_check_branch
      %49 = sbr.rel (0) target = $region37
    $region36: #{tpu_custom_call.1} parent=1 // pred_region
      %51 = vsyncadd [#allocation6], 0
      %s52 = sshll.u32 %s8, 4
      %s53 = int_to_ptr.hbm [resolvable:$true] %s52
      %s54 = sshll.u32 [#allocation5], 4
      %s55 = int_to_ptr.vmem [resolvable:$true] %s54
      %60 = dma.hbm_to_vmem [thread:$0]  %s53, 256, %s55, [#allocation6], 128, 128, 8
    $region37: #{tpu_custom_call.1} parent=1 // pred_fallthru
      _
    // Predicated region
    $region38: #{tpu_custom_call.1} parent=1 // pred_check
      _
    $region39: #{tpu_custom_call.1} parent=1 // pred_check_branch
      %62 = sbr.rel (0) target = $region41
    $region40: #{tpu_custom_call.1} parent=1 // pred_region
      %64 = vsyncadd [#allocation6], 0
      %s65 = sshll.u32 %s9, 4
      %s66 = int_to_ptr.hbm [resolvable:$true] %s65
      %s67 = sshll.u32 [#allocation7], 4
      %s68 = int_to_ptr.vmem [resolvable:$true] %s67
      %73 = dma.hbm_to_vmem [thread:$0]  %s66, 256, %s68, [#allocation6], 128, 128, 8
    $region41: #{tpu_custom_call.1} parent=1 // pred_fallthru
      _
    // Predicated region
    $region42: #{tpu_custom_call.1} parent=1 // pred_check
      _
    $region43: #{tpu_custom_call.1} parent=1 // pred_check_branch
      %75 = sbr.rel (0) target = $region45
    $region44: #{tpu_custom_call.1} parent=1 // pred_region
      _
    $region45: #{tpu_custom_call.1} parent=1 // pred_fallthru
      _
    // Predicated region
    $region46: #{tpu_custom_call.1} parent=1 // pred_check
      _
    $region47: #{tpu_custom_call.1} parent=1 // pred_check_branch
      %77 = sbr.rel (0) target = $region49
    $region48: #{tpu_custom_call.1} parent=1 // pred_region
      _
    $region49: #{tpu_custom_call.1} parent=1 // pred_fallthru
      _
    // Predicated region
    $region50: #{tpu_custom_call.1} parent=1 // pred_check
      _
    $region51: #{tpu_custom_call.1} parent=1 // pred_check_branch
      %79 = sbr.rel (0) target = $region53
    $region52: #{tpu_custom_call.1} parent=1 // pred_region
      _
    $region53: #{tpu_custom_call.1} parent=1 // pred_fallthru
      _
    // Predicated region
    $region54: #{tpu_custom_call.1} parent=1 // pred_check
      _
    $region55: #{tpu_custom_call.1} parent=1 // pred_check_branch
      %81 = sbr.rel (0) target = $region57
    $region56: #{tpu_custom_call.1} parent=1 // pred_region
      _
    $region57: #{tpu_custom_call.1} parent=1 // pred_fallthru
      _
    // Predicated region
    $region58: #{tpu_custom_call.1} parent=1 // pred_check
      _
    $region59: #{tpu_custom_call.1} parent=1 // pred_check_branch
      %83 = sbr.rel (0) target = $region61
    $region60: #{tpu_custom_call.1} parent=1 // pred_region
      _
    $region61: #{tpu_custom_call.1} parent=1 // pred_fallthru
      _
    // Predicated region
    $region62: #{tpu_custom_call.1} parent=1 // pred_check
      _
    $region63: #{tpu_custom_call.1} parent=1 // pred_check_branch
      %85 = sbr.rel (0) target = $region65
    $region64: #{tpu_custom_call.1} parent=1 // pred_region
      %87 = dma.done [#allocation3], 32
    $region65: #{tpu_custom_call.1} parent=1 // pred_fallthru
      _
    // Predicated region
    $region66: #{tpu_custom_call.1} parent=1 // pred_check
      _
    $region67: #{tpu_custom_call.1} parent=1 // pred_check_branch
      %89 = sbr.rel (0) target = $region69
    $region68: #{tpu_custom_call.1} parent=1 // pred_region
      %91 = dma.done [#allocation6], 256
    $region69: #{tpu_custom_call.1} parent=1 // pred_fallthru
      _
    // Predicated region
    $region70: #{tpu_custom_call.1} parent=1 // pred_check
      _
    $region71: #{tpu_custom_call.1} parent=1 // pred_check_branch
      %93 = sbr.rel (0) target = $region73
    $region72: #{tpu_custom_call.1} parent=1 // pred_region
      %95 = dma.done [#allocation6], 256
    $region73: #{tpu_custom_call.1} parent=1 // pred_fallthru
      _
    %v96 = vld [vmem:[%s0] sm:$0xff]
    %v97 = vld [vmem:[%s0 + $0x8] sm:$0xff]
    %v98 = vld [vmem:[%s0 + $0x10] sm:$0xff]
    %v99 = vld [vmem:[%s0 + $0x18] sm:$0xff]
    %v100 = vld [vmem:[%s2] sm:$0xf]
    %v101 = vld [vmem:[%s3] sm:$0x1]
    %v103 = vperm.slane %v101, 0
    %vm105 = vcmask 31744
    %v107 = vsel %vm105, %v96, 0
    %v110 = vsel %vm105, %v97, 0
    %v113 = vsel %vm105, %v98, 0
    %v116 = vsel %vm105, %v99, 0
    %vm118 = vcmask 1043456
    %v120 = vsel %vm118, %v100, 0
    %122 = vmatpush.msra.mxu0 0.0
    %123 = vmatpush.msra.mxu0 0.0
    %124 = vmatpush.msra.mxu0 0.0
    %125 = vmatpush.msra.mxu0 0.0
    %126 = vmatpush.msra.mxu0 0.0
    %127 = vmatpush.msra.mxu0 0.0
    %128 = vmatpush.msra.mxu0 0.0
    %129 = vmatpush.msra.mxu0 0.0
    %130 = vmatpush.msra.mxu0 0.0
    %131 = vmatpush.msra.mxu0 0.0
    %132 = vmatpush.msra.mxu0 0.0
    %133 = vmatpush.msra.mxu0 0.0
    %134 = vmatpush.msra.mxu0 0.0
    %135 = vmatpush.msra.mxu0 0.0
    %136 = vmatpush.msra.mxu0 0.0
    %137 = vmatpush.msra.mxu0 %v120
    %138 = vmatmul.f32.gmra.mxu0 %v107
    %v139 = vpop.f32.mrf.mxu0
    %v140 = vadd.f32 %v103, %v139
    %141 = vmatmul.f32.gmra.mxu0 %v110
    %v142 = vpop.f32.mrf.mxu0
    %v143 = vadd.f32 %v103, %v142
    %144 = vmatmul.f32.gmra.mxu0 %v113
    %v145 = vpop.f32.mrf.mxu0
    %v146 = vadd.f32 %v103, %v145
    %147 = vmatmul.f32.gmra.mxu0 %v116
    %v148 = vpop.f32.mrf.mxu0
    %v149 = vadd.f32 %v103, %v148
    %150 = vdwg.mxu0
    %vm151 = vcmp.gt.f32.partialorder %v140, 0.0
    %vm152 = vcmp.gt.f32.partialorder %v143, 0.0
    %vm153 = vcmp.gt.f32.partialorder %v146, 0.0
    %vm154 = vcmp.gt.f32.partialorder %v149, 0.0
    %v155 = vmul.f32 %v140, 0.01
    %v156 = vmul.f32 %v143, 0.01
    %v157 = vmul.f32 %v146, 0.01
    %v158 = vmul.f32 %v149, 0.01
    %v159 = vsel %vm151, %v140, %v155
    %v160 = vsel %vm152, %v143, %v156
    %v161 = vsel %vm153, %v146, %v157
    %v162 = vsel %vm154, %v149, %v158
    %v163 = vld [vmem:[%s4] sm:$0xff]
    %v164 = vld [vmem:[%s4 + $0x8] sm:$0xff]
    %v165 = vld [vmem:[%s4 + $0x10] sm:$0xff]
    %v166 = vld [vmem:[%s4 + $0x18] sm:$0xff]
    %v167 = vld [vmem:[%s5] sm:$0x1]
    %v169 = vperm.slane %v167, 0
    %vm171 = vcmask 261120
    %v173 = vsel %vm171, %v159, 0
    %v176 = vsel %vm171, %v160, 0
    %v179 = vsel %vm171, %v161, 0
    %v182 = vsel %vm171, %v162, 0
    %184 = vmatpush.msra.mxu0 0.0
    %185 = vmatpush.msra.mxu0 0.0
    %186 = vmatpush.msra.mxu0 0.0
    %187 = vmatpush.msra.mxu0 0.0
    %188 = vmatpush.msra.mxu0 0.0
    %189 = vmatpush.msra.mxu0 0.0
    %190 = vmatpush.msra.mxu0 0.0
    %191 = vmatpush.msra.mxu0 0.0
    %192 = vmatpush.msra.mxu0 0.0
    %193 = vmatpush.msra.mxu0 0.0
    %194 = vmatpush.msra.mxu0 0.0
    %195 = vmatpush.msra.mxu0 0.0
    %196 = vmatpush.msra.mxu0 %v166
    %197 = vmatpush.msra.mxu0 %v165
    %198 = vmatpush.msra.mxu0 %v164
    %199 = vmatpush.msra.mxu0 %v163
    %200 = vmatmul.f32.gmra.mxu0 %v173
    %v201 = vpop.f32.mrf.mxu0
    %v202 = vadd.f32 %v169, %v201
    %203 = vmatmul.f32.gmra.mxu0 %v176
    %v204 = vpop.f32.mrf.mxu0
    %v205 = vadd.f32 %v169, %v204
    %206 = vmatmul.f32.gmra.mxu0 %v179
    %v207 = vpop.f32.mrf.mxu0
    %v208 = vadd.f32 %v169, %v207
    %209 = vmatmul.f32.gmra.mxu0 %v182
    %v210 = vpop.f32.mrf.mxu0
    %v211 = vadd.f32 %v169, %v210
    %212 = vdwg.mxu0
    %vm213 = vcmp.gt.f32.partialorder %v202, 0.0
    %vm214 = vcmp.gt.f32.partialorder %v205, 0.0
    %vm215 = vcmp.gt.f32.partialorder %v208, 0.0
    %vm216 = vcmp.gt.f32.partialorder %v211, 0.0
    %v217 = vmul.f32 %v202, 0.01
    %v218 = vmul.f32 %v205, 0.01
    %v219 = vmul.f32 %v208, 0.01
    %v220 = vmul.f32 %v211, 0.01
    %v221 = vsel %vm213, %v202, %v217
    %v222 = vsel %vm214, %v205, %v218
    %v223 = vsel %vm215, %v208, %v219
    %v224 = vsel %vm216, %v211, %v220
    %v225 = vld [vmem:[%s6] sm:$0xff]
    %v226 = vld [vmem:[%s6 + $0x8] sm:$0xff]
    %v227 = vld [vmem:[%s6 + $0x10] sm:$0xff]
    %v228 = vld [vmem:[%s6 + $0x18] sm:$0xff]
    %v229 = vld [vmem:[%s6 + $0x20] sm:$0xff]
    %v230 = vld [vmem:[%s6 + $0x28] sm:$0xff]
    %v231 = vld [vmem:[%s6 + $0x30] sm:$0xff]
    %v232 = vld [vmem:[%s6 + $0x38] sm:$0xff]
    %v233 = vld [vmem:[%s7] sm:$0x1]
    %v235 = vperm.slane %v233, 0
    %vm237 = vcmask 523264
    %v239 = vsel %vm237, %v221, 0
    %v242 = vsel %vm237, %v222, 0
    %v245 = vsel %vm237, %v223, 0
    %v248 = vsel %vm237, %v224, 0
    %250 = vmatpush.msra.mxu0 0.0
    %251 = vmatpush.msra.mxu0 0.0
    %252 = vmatpush.msra.mxu0 0.0
    %253 = vmatpush.msra.mxu0 0.0
    %254 = vmatpush.msra.mxu0 0.0
    %255 = vmatpush.msra.mxu0 0.0
    %256 = vmatpush.msra.mxu0 0.0
    %257 = vmatpush.msra.mxu0 0.0
    %258 = vmatpush.msra.mxu0 %v232
    %259 = vmatpush.msra.mxu0 %v231
    %260 = vmatpush.msra.mxu0 %v230
    %261 = vmatpush.msra.mxu0 %v229
    %262 = vmatpush.msra.mxu0 %v228
    %263 = vmatpush.msra.mxu0 %v227
    %264 = vmatpush.msra.mxu0 %v226
    %265 = vmatpush.msra.mxu0 %v225
    %266 = vmatmul.f32.gmra.mxu0 %v239
    %v267 = vpop.f32.mrf.mxu0
    %v268 = vadd.f32 %v235, %v267
    %269 = vmatmul.f32.gmra.mxu0 %v242
    %v270 = vpop.f32.mrf.mxu0
    %v271 = vadd.f32 %v235, %v270
    %272 = vmatmul.f32.gmra.mxu0 %v245
    %v273 = vpop.f32.mrf.mxu0
    %v274 = vadd.f32 %v235, %v273
    %275 = vmatmul.f32.gmra.mxu0 %v248
    %v276 = vpop.f32.mrf.mxu0
    %v277 = vadd.f32 %v235, %v276
    %278 = vdwg.mxu0
    %vm279 = vcmask 130048
    %v280 = vsel %vm279, %v268, -inf
    %v281 = vsel %vm279, %v271, -inf
    %v282 = vmax.f32 %v280, %v281
    %v283 = vrot.slane %v282, 4
    %v284 = vmax.f32 %v282, %v283
    %v285 = vrot.slane %v284, 2
    %v286 = vmax.f32 %v284, %v285
    %v287 = vrot.slane %v286, 1
    %v288 = vmax.f32 %v286, %v287
    %v289 = vsel %vm279, %v274, -inf
    %v290 = vsel %vm279, %v277, -inf
    %v291 = vmax.f32 %v289, %v290
    %v292 = vrot.slane %v291, 4
    %v293 = vmax.f32 %v291, %v292
    %v294 = vrot.slane %v293, 2
    %v295 = vmax.f32 %v293, %v294
    %v296 = vrot.slane %v295, 1
    %v297 = vmax.f32 %v295, %v296
    %v298 = vld [vmem:[#allocation2] sm:$0x3]
    %v299 = vld [vmem:[#allocation5] sm:$0xff]
    %v300 = vld [vmem:[#allocation5 + $0x8] sm:$0xff]
    %v301 = vld [vmem:[#allocation7] sm:$0xff]
    %v302 = vld [vmem:[#allocation7 + $0x8] sm:$0x1]
    %vm303 = vcmask 72704
    %v305 = vsel %vm303, %v298, 0
    %vm307 = vcmask 1040384
    %v309 = vsel %vm307, %v302, 0
    %311 = vmatpush.msra.mxu0 0.0
    %312 = vmatpush.msra.mxu0 0.0
    %313 = vmatpush.msra.mxu0 0.0
    %314 = vmatpush.msra.mxu0 0.0
    %315 = vmatpush.msra.mxu0 0.0
    %316 = vmatpush.msra.mxu0 0.0
    %317 = vmatpush.msra.mxu0 0.0
    %318 = vmatpush.msra.mxu0 0.0
    %319 = vmatpush.msra.mxu0 0.0
    %320 = vmatpush.msra.mxu0 0.0
    %321 = vmatpush.msra.mxu0 0.0
    %322 = vmatpush.msra.mxu0 0.0
    %323 = vmatpush.msra.mxu0 0.0
    %324 = vmatpush.msra.mxu0 0.0
    %325 = vmatpush.msra.mxu0 %v309
    %326 = vmatpush.msra.mxu0 %v301
    %327 = vmatmul.f32.gmra.mxu0 %v305
    %v328 = vpop.f32.mrf.mxu0
    %v329 = vadd.f32 0.0, %v328
    %330 = vdwg.mxu0
    %vm333 = vcmask 1041409
    %v334 = vsel %vm333, %v297, %v288
    %v335 = vsel %vm279, %v334, 0
    %337 = vmatpush.msra.mxu0 0.0
    %338 = vmatpush.msra.mxu0 0.0
    %339 = vmatpush.msra.mxu0 0.0
    %340 = vmatpush.msra.mxu0 0.0
    %341 = vmatpush.msra.mxu0 0.0
    %342 = vmatpush.msra.mxu0 0.0
    %343 = vmatpush.msra.mxu0 0.0
    %344 = vmatpush.msra.mxu0 0.0
    %345 = vmatpush.msra.mxu0 0.0
    %346 = vmatpush.msra.mxu0 0.0
    %347 = vmatpush.msra.mxu0 0.0
    %348 = vmatpush.msra.mxu0 0.0
    %349 = vmatpush.msra.mxu0 0.0
    %350 = vmatpush.msra.mxu0 0.0
    %351 = vmatpush.msra.mxu0 %v300
    %352 = vmatpush.msra.mxu0 %v299
    %353 = vmatmul.f32.gmra.mxu0 %v335
    %v354 = vpop.f32.mrf.mxu0
    %v355 = vadd.f32 %v329, %v354
    %356 = vdwg.mxu0
    %v357 = vld [vmem:[%s10] sm:$0x1]
    %v359 = vperm.slane %v357, 0
    %v361 = vadd.f32 %v355, %v359
    %vm362 = vcmp.gt.f32.partialorder %v361, 0.0
    %v363 = vmul.f32 %v361, 0.01
    %v364 = vsel %vm362, %v361, %v363
    %v365 = vld [vmem:[%s11] sm:$0xff]
    %v366 = vld [vmem:[%s11 + $0x8] sm:$0xff]
    %v367 = vld [vmem:[%s11 + $0x10] sm:$0xff]
    %v368 = vld [vmem:[%s11 + $0x18] sm:$0xff]
    %v369 = vld [vmem:[%s12] sm:$0x1]
    %v371 = vperm.slane %v369, 0
    %v374 = vsel %vm171, %v364, 0
    %376 = vmatpush.msra.mxu0 0.0
    %377 = vmatpush.msra.mxu0 0.0
    %378 = vmatpush.msra.mxu0 0.0
    %379 = vmatpush.msra.mxu0 0.0
    %380 = vmatpush.msra.mxu0 0.0
    %381 = vmatpush.msra.mxu0 0.0
    %382 = vmatpush.msra.mxu0 0.0
    %383 = vmatpush.msra.mxu0 0.0
    %384 = vmatpush.msra.mxu0 0.0
    %385 = vmatpush.msra.mxu0 0.0
    %386 = vmatpush.msra.mxu0 0.0
    %387 = vmatpush.msra.mxu0 0.0
    %388 = vmatpush.msra.mxu0 %v368
    %389 = vmatpush.msra.mxu0 %v367
    %390 = vmatpush.msra.mxu0 %v366
    %391 = vmatpush.msra.mxu0 %v365
    %392 = vmatmul.f32.gmra.mxu0 %v374
    %v393 = vpop.f32.mrf.mxu0
    %v394 = vadd.f32 %v371, %v393
    %395 = vdwg.mxu0
    %vm396 = vcmp.gt.f32.partialorder %v394, 0.0
    %v397 = vmul.f32 %v394, 0.01
    %v398 = vsel %vm396, %v394, %v397
    %v399 = vld [vmem:[%s13] sm:$0xff]
    %v400 = vld [vmem:[%s13 + $0x8] sm:$0xff]
    %v401 = vld [vmem:[%s13 + $0x10] sm:$0xff]
    %v402 = vld [vmem:[%s13 + $0x18] sm:$0xff]
    %v403 = vld [vmem:[%s14] sm:$0x1]
    %v405 = vperm.slane %v403, 0
    %v408 = vsel %vm171, %v398, 0
    %410 = vmatpush.msra.mxu0 0.0
    %411 = vmatpush.msra.mxu0 0.0
    %412 = vmatpush.msra.mxu0 0.0
    %413 = vmatpush.msra.mxu0 0.0
    %414 = vmatpush.msra.mxu0 0.0
    %415 = vmatpush.msra.mxu0 0.0
    %416 = vmatpush.msra.mxu0 0.0
    %417 = vmatpush.msra.mxu0 0.0
    %418 = vmatpush.msra.mxu0 0.0
    %419 = vmatpush.msra.mxu0 0.0
    %420 = vmatpush.msra.mxu0 0.0
    %421 = vmatpush.msra.mxu0 0.0
    %422 = vmatpush.msra.mxu0 %v402
    %423 = vmatpush.msra.mxu0 %v401
    %424 = vmatpush.msra.mxu0 %v400
    %425 = vmatpush.msra.mxu0 %v399
    %426 = vmatmul.f32.gmra.mxu0 %v408
    %v427 = vpop.f32.mrf.mxu0
    %v428 = vadd.f32 %v405, %v427
    %429 = vdwg.mxu0
    %430 = vst [vmem:[#allocation8] sm:$0x3] %v428
    // Predicated region
    $region74: #{tpu_custom_call.1} parent=1 // pred_check
      _
    $region75: #{tpu_custom_call.1} parent=1 // pred_check_branch
      %432 = sbr.rel (0) target = $region77
    $region76: #{tpu_custom_call.1} parent=1 // pred_region
      %434 = vsyncadd [#allocation4], 0
      %s436 = sshll.u32 [#allocation8], 4
      %s437 = int_to_ptr.vmem [resolvable:$true] %s436
      %s438 = sshll.u32 %s15, 4
      %s439 = int_to_ptr.hbm [resolvable:$true] %s438
      %441 = dma.vmem_to_hbm [thread:$0]  %s437, 32, %s439, [#allocation4]
    $region77: #{tpu_custom_call.1} parent=1 // pred_fallthru
      _
    // Predicated region
    $region78: #{tpu_custom_call.1} parent=1 // pred_check
      _
    $region79: #{tpu_custom_call.1} parent=1 // pred_check_branch
      %443 = sbr.rel (0) target = $region81
    $region80: #{tpu_custom_call.1} parent=1 // pred_region
      %445 = dma.done [#allocation4], 32
    $region81: #{tpu_custom_call.1} parent=1 // pred_fallthru
      _
    %446 = vsyncpa [#allocation3], 1
    %447 = vsyncpa [#allocation6], 1
    %448 = vsyncpa [#allocation4], 1

</llo_original>
